<compile_context>
chip_gen: v7x
topology: tpu7x:2x2x1
jax: 0.10.0
libtpu: 0.0.40
codegen_flags: <defaults>
</compile_context>

<pallas_src>
import functools

import jax
import jax.numpy as jnp
from jax.experimental import pallas as pl
from jax.experimental.pallas import tpu as pltpu

LN_EPS = 1e-12


# ---------------------------------------------------------------------------
# Kernel
# ---------------------------------------------------------------------------
def _bert_self_output_kernel(h_ref, inp_ref, w_ref, params_ref, o_ref, *,
                             inv_h):
    # dense: x @ W (native-dtype MXU operands, f32 accumulation)
    y = jnp.dot(h_ref[...], w_ref[...], preferred_element_type=jnp.float32)

    # bias / gamma / beta packed as rows of a single (3, H) f32 operand.
    p = params_ref[...].astype(jnp.float32)
    bias, gamma, beta = p[0:1, :], p[1:2, :], p[2:3, :]

    # TODO(synk): dropout is identity here (inference path); stochastic
    # masking via pltpu.prng_* could be added behind a flag for training.

    # + bias, + residual (f32)
    y = y + bias + inp_ref[...].astype(jnp.float32)

    # LayerNorm (TF style, eps inside the sqrt) with two-pass centered
    # variance, all in f32.
    mean = jnp.sum(y, axis=-1, keepdims=True) * inv_h
    d = y - mean
    var = jnp.sum(d * d, axis=-1, keepdims=True) * inv_h
    xn = d * jax.lax.rsqrt(var + LN_EPS)

    o_ref[...] = (gamma * xn + beta).astype(o_ref.dtype)


# ---------------------------------------------------------------------------
# Tiling / VMEM bookkeeping
# ---------------------------------------------------------------------------
def _vmem_budget_and_capacity():
    """Generation-aware VMEM tile budget (bytes) and physical capacity."""
    try:
        cap = int(pltpu.get_tpu_info().vmem_capacity_bytes)
    except Exception:  # pragma: no cover - non-TPU / older jax fallback
        cap = 64 * 1024 * 1024
    if cap >= 100 * 1024 * 1024:          # v5e / v6e: 128 MiB physical
        budget = 96 * 1024 * 1024
    else:                                  # v7x: 64 MiB per TensorCore
        budget = max(24 * 1024 * 1024, cap // 2)
    return budget, cap


def _working_set_bytes(bm, h, act_itemsize, w_itemsize, w_buffers):
    # streaming h/inp/out tiles double-buffered + f32 intermediate(s)
    # + resident W (w_buffers copies) + packed params.
    return (6 * bm * h * act_itemsize          # h, inp, out tiles x2 buffers
            + 2 * bm * h * 4                   # f32 y / normalized intermediates
            + w_buffers * h * h * w_itemsize   # resident weight
            + w_buffers * 3 * h * 4)           # bias/gamma/beta


def _pick_block_rows(requested, m, h, act_itemsize, w_itemsize, vmem_budget,
                     w_buffers):
    """Round to the dtype's sublane tile, cap by M, >=2 grid steps, VMEM."""
    sub = 8 if act_itemsize >= 4 else (16 if act_itemsize == 2 else 32)
    rnd_up = lambda x: ((x + sub - 1) // sub) * sub
    bm = max(sub, (requested // sub) * sub)
    m_ceil = rnd_up(m)
    bm = min(bm, m_ceil)
    # Keep at least 2 grid steps when possible so the single "parallel" axis
    # can be sharded across both TensorCores on v7x.
    if m_ceil > sub:
        bm = min(bm, max(sub, rnd_up(pl.cdiv(m, 2))))
    while bm > sub and _working_set_bytes(bm, h, act_itemsize, w_itemsize,
                                          w_buffers) > vmem_budget:
        bm = max(sub, ((bm // 2) // sub) * sub)
    return bm


def _const_spec(shape, single_buffer):
    """BlockSpec for an operand that is identical for every grid step."""
    if single_buffer:
        # One DMA, one buffer: no point double-buffering a constant block.
        return pl.BlockSpec(shape, lambda i: (0, 0),
                            pipeline_mode=pl.Buffered(1))
    return pl.BlockSpec(shape, lambda i: (0, 0))


# ---------------------------------------------------------------------------
# pallas_call core
# ---------------------------------------------------------------------------
@functools.partial(jax.jit,
                   static_argnames=("block_rows", "single_buffer_consts"))
def _bert_self_output_core(h2, i2, w_t, params, *, block_rows=512,
                           single_buffer_consts=True):
    M, H = h2.shape
    act_bytes = h2.dtype.itemsize
    w_bytes = w_t.dtype.itemsize
    budget, cap = _vmem_budget_and_capacity()
    w_buffers = 1 if single_buffer_consts else 2

    bm = _pick_block_rows(block_rows, M, H, act_bytes, w_bytes, budget,
                          w_buffers)
    grid_m = pl.cdiv(M, bm)            # ragged M handled by a partial block

    ws = _working_set_bytes(bm, H, act_bytes, w_bytes, w_buffers)
    vmem_limit = int(min(max(ws + ws // 4 + (2 << 20), 32 << 20),
                         cap * 7 // 8))

    kernel = functools.partial(_bert_self_output_kernel, inv_h=1.0 / H)
    cost = pl.CostEstimate(
        flops=2 * M * H * H,
        transcendentals=M,  # one rsqrt per row
        bytes_accessed=3 * M * H * act_bytes + H * H * w_bytes + 3 * H * 4,
    )

    return pl.pallas_call(
        kernel,
        out_shape=jax.ShapeDtypeStruct((M, H), h2.dtype),
        grid_spec=pltpu.PrefetchScalarGridSpec(
            num_scalar_prefetch=0,
            grid=(grid_m,),
            in_specs=[
                pl.BlockSpec((bm, H), lambda i: (i, 0)),   # hidden rows
                pl.BlockSpec((bm, H), lambda i: (i, 0)),   # residual rows
                _const_spec((H, H), single_buffer_consts),  # W (resident)
                _const_spec((3, H), single_buffer_consts),  # bias/gamma/beta
            ],
            out_specs=pl.BlockSpec((bm, H), lambda i: (i, 0)),
        ),
        compiler_params=pltpu.CompilerParams(
            dimension_semantics=("parallel",),
            vmem_limit_bytes=vmem_limit,
        ),
        cost_estimate=cost,
    )(h2, i2, w_t, params)


# ---------------------------------------------------------------------------
# Public wrapper
# ---------------------------------------------------------------------------
def prepare_bert_self_output_params(weight, bias, gamma, beta,
                                    act_dtype=jnp.float32):
    """One-time reformat: transpose nn.Linear weight to [H_in, H_out] and cast
    it to the activation dtype (full MXU rate, half the resident VMEM for
    bf16); pack bias/gamma/beta into a single (3, H) f32 operand."""
    w_t = jnp.asarray(weight).T.astype(act_dtype)
    params = jnp.stack([
        jnp.asarray(bias, dtype=jnp.float32),
        jnp.asarray(gamma, dtype=jnp.float32),
        jnp.asarray(beta, dtype=jnp.float32),
    ], axis=0)
    return w_t, params


def bert_self_output(hidden_states, input_tensor, weight, bias, gamma, beta,
                     block_rows=512):
    """hidden_states, input_tensor: [B, S, H]; weight: [H_out, H_in]
    (PyTorch nn.Linear layout); bias/gamma/beta: [H]."""
    B, S, H = hidden_states.shape
    # Real callers should hoist this prep out of the per-step path.
    w_t, params = prepare_bert_self_output_params(
        weight, bias, gamma, beta, act_dtype=hidden_states.dtype)
    h2 = hidden_states.reshape(B * S, H)
    i2 = input_tensor.reshape(B * S, H)
    try:
        out = _bert_self_output_core(h2, i2, w_t, params,
                                     block_rows=block_rows,
                                     single_buffer_consts=True)
        out = jax.block_until_ready(out)
    except Exception:
        # Fallback for jax builds that reject pl.Buffered(1) on a pallas_call
        # BlockSpec: identical kernel, default (double-buffered) constants.
        out = _bert_self_output_core(h2, i2, w_t, params,
                                     block_rows=block_rows,
                                     single_buffer_consts=False)
    return out.reshape(B, S, H)


# ---------------------------------------------------------------------------
# Reference & self-test
# ---------------------------------------------------------------------------
def _reference(hidden_states, input_tensor, weight, bias, gamma, beta):
    y = jnp.einsum("bsh,oh->bso", hidden_states, weight) + bias
    y = y + input_tensor
    u = jnp.mean(y, axis=-1, keepdims=True)
    s = jnp.mean((y - u) ** 2, axis=-1, keepdims=True)
    xn = (y - u) / jnp.sqrt(s + LN_EPS)
    return gamma * xn + beta


if __name__ == "__main__":
    key = jax.random.PRNGKey(0)
    k1, k2, k3, k4 = jax.random.split(key, 4)

    B, S, H = 2, 8, 128
    hidden_states = jax.random.normal(k1, (B, S, H), dtype=jnp.float32)
    input_tensor = jax.random.normal(k2, (B, S, H), dtype=jnp.float32)

    # deterministic parameter init (nn.Linear-like weight/bias, LN gamma/beta)
    weight = jax.random.normal(k3, (H, H), dtype=jnp.float32) * (1.0 / H) ** 0.5
    bias = jax.random.normal(k4, (H,), dtype=jnp.float32) * 0.02
    gamma = jnp.ones((H,), dtype=jnp.float32)
    beta = jnp.zeros((H,), dtype=jnp.float32)

    out = bert_self_output(hidden_states, input_tensor, weight, bias, gamma,
                           beta)
    out = jax.block_until_ready(out)
    ref = _reference(hidden_states, input_tensor, weight, bias, gamma, beta)
    assert out.shape == (B, S, H)
    assert jnp.allclose(out, ref, atol=1e-4, rtol=1e-4)

    # ragged-M path (B*S not a multiple of the row tile -> partial last block)
    S2 = 5
    hs2 = jax.random.normal(k1, (B, S2, H), dtype=jnp.float32)
    it2 = jax.random.normal(k2, (B, S2, H), dtype=jnp.float32)
    out2 = jax.block_until_ready(
        bert_self_output(hs2, it2, weight, bias, gamma, beta))
    ref2 = _reference(hs2, it2, weight, bias, gamma, beta)
    assert out2.shape == (B, S2, H)
    assert jnp.allclose(out2, ref2, atol=1e-4, rtol=1e-4)

    print("KERNEL_OK")
</pallas_src>

<mosaic_0001>
module attributes {stable_mosaic.version = 11 : i64} {
  func.func @_bert_self_output_kernel(%arg0: i32, %arg1: memref<8x128xf32, #tpu.memory_space<vmem>>, %arg2: memref<8x128xf32, #tpu.memory_space<vmem>>, %arg3: memref<128x128xf32, #tpu.memory_space<vmem>>, %arg4: memref<3x128xf32, #tpu.memory_space<vmem>>, %arg5: memref<8x128xf32, #tpu.memory_space<vmem>>) attributes {dimension_semantics = [#tpu.dimension_semantics<parallel>], iteration_bounds = array<i64: 2>, scalar_prefetch = 0 : i64, scratch_operands = 0 : i64, tpu.core_type = #tpu.core_type<tc>, window_params = [{transform_indices = @transform_0, window_bounds = array<i64: 8, 128>}, {transform_indices = @transform_1, window_bounds = array<i64: 8, 128>}, {pipeline_mode = #tpu.pipeline_mode<synchronous>, transform_indices = @transform_2, window_bounds = array<i64: 128, 128>}, {pipeline_mode = #tpu.pipeline_mode<synchronous>, transform_indices = @transform_3, window_bounds = array<i64: 3, 128>}, {transform_indices = @transform_4, window_bounds = array<i64: 8, 128>}]} {
    %c0 = arith.constant 0 : index
    %c0_0 = arith.constant 0 : index
    %0 = vector.load %arg1[%c0, %c0_0] : memref<8x128xf32, #tpu.memory_space<vmem>>, vector<8x128xf32>
    %c0_1 = arith.constant 0 : index
    %c0_2 = arith.constant 0 : index
    %1 = vector.load %arg3[%c0_1, %c0_2] : memref<128x128xf32, #tpu.memory_space<vmem>>, vector<128x128xf32>
    %cst = arith.constant dense<0.000000e+00> : vector<8x128xf32>
    %2 = tpu.matmul %0, %1, %cst {dimension_numbers = #tpu.dot_dimension_numbers<[1], [0], [0], [1], [0, 0, 1, 1], [], []>} : vector<8x128xf32>, vector<128x128xf32>, vector<8x128xf32> -> vector<8x128xf32>
    %c0_3 = arith.constant 0 : index
    %c0_4 = arith.constant 0 : index
    %3 = vector.load %arg4[%c0_3, %c0_4] : memref<3x128xf32, #tpu.memory_space<vmem>>, vector<3x128xf32>
    %4 = vector.extract_strided_slice %3 {offsets = [0, 0], sizes = [1, 128], strides = [1, 1]} : vector<3x128xf32> to vector<1x128xf32>
    %5 = vector.extract_strided_slice %3 {offsets = [1, 0], sizes = [1, 128], strides = [1, 1]} : vector<3x128xf32> to vector<1x128xf32>
    %6 = vector.extract_strided_slice %3 {offsets = [2, 0], sizes = [1, 128], strides = [1, 1]} : vector<3x128xf32> to vector<1x128xf32>
    %7 = vector.broadcast %4 : vector<1x128xf32> to vector<8x128xf32>
    %8 = arith.addf %2, %7 : vector<8x128xf32>
    %c0_5 = arith.constant 0 : index
    %c0_6 = arith.constant 0 : index
    %9 = vector.load %arg2[%c0_5, %c0_6] : memref<8x128xf32, #tpu.memory_space<vmem>>, vector<8x128xf32>
    %10 = arith.addf %8, %9 : vector<8x128xf32>
    %cst_7 = arith.constant dense<0.000000e+00> : vector<8xf32>
    %11 = vector.multi_reduction <add>, %10, %cst_7 [1] : vector<8x128xf32> to vector<8xf32>
    %12 = vector.shape_cast %11 : vector<8xf32> to vector<8x1xf32>
    %cst_8 = arith.constant 7.812500e-03 : f32
    %13 = vector.broadcast %cst_8 : f32 to vector<8x1xf32>
    %14 = arith.mulf %12, %13 : vector<8x1xf32>
    %15 = vector.broadcast %14 : vector<8x1xf32> to vector<8x128xf32>
    %16 = arith.subf %10, %15 : vector<8x128xf32>
    %17 = arith.mulf %16, %16 : vector<8x128xf32>
    %cst_9 = arith.constant dense<0.000000e+00> : vector<8xf32>
    %18 = vector.multi_reduction <add>, %17, %cst_9 [1] : vector<8x128xf32> to vector<8xf32>
    %19 = vector.shape_cast %18 : vector<8xf32> to vector<8x1xf32>
    %cst_10 = arith.constant 7.812500e-03 : f32
    %20 = vector.broadcast %cst_10 : f32 to vector<8x1xf32>
    %21 = arith.mulf %19, %20 : vector<8x1xf32>
    %cst_11 = arith.constant 9.99999996E-13 : f32
    %22 = vector.broadcast %cst_11 : f32 to vector<8x1xf32>
    %23 = arith.addf %21, %22 : vector<8x1xf32>
    %24 = math.rsqrt %23 : vector<8x1xf32>
    %25 = vector.broadcast %24 : vector<8x1xf32> to vector<8x128xf32>
    %26 = arith.mulf %16, %25 : vector<8x128xf32>
    %27 = vector.broadcast %5 : vector<1x128xf32> to vector<8x128xf32>
    %28 = arith.mulf %27, %26 : vector<8x128xf32>
    %29 = vector.broadcast %6 : vector<1x128xf32> to vector<8x128xf32>
    %30 = arith.addf %28, %29 : vector<8x128xf32>
    %c0_12 = arith.constant 0 : index
    %c0_13 = arith.constant 0 : index
    %31 = vector.load %arg5[%c0_12, %c0_13] : memref<8x128xf32, #tpu.memory_space<vmem>>, vector<8x128xf32>
    tpu.vector_store %arg5[%c0_12, %c0_13], %30 {strides = array<i32>} : memref<8x128xf32, #tpu.memory_space<vmem>>, vector<8x128xf32>,
    return
  }
  func.func @transform_0(%arg0: i32) -> (i32, i32) {
    %c0_i32 = arith.constant 0 : i32
    %c0_i32_0 = arith.constant 0 : i32
    return %arg0, %c0_i32 : i32, i32
  }
  func.func @transform_1(%arg0: i32) -> (i32, i32) {
    %c0_i32 = arith.constant 0 : i32
    %c0_i32_0 = arith.constant 0 : i32
    return %arg0, %c0_i32 : i32, i32
  }
  func.func @transform_2(%arg0: i32) -> (i32, i32) {
    %c0_i32 = arith.constant 0 : i32
    %c0_i32_0 = arith.constant 0 : i32
    %c0_i32_1 = arith.constant 0 : i32
    return %c0_i32, %c0_i32_0 : i32, i32
  }
  func.func @transform_3(%arg0: i32) -> (i32, i32) {
    %c0_i32 = arith.constant 0 : i32
    %c0_i32_0 = arith.constant 0 : i32
    %c0_i32_1 = arith.constant 0 : i32
    return %c0_i32, %c0_i32_0 : i32, i32
  }
  func.func @transform_4(%arg0: i32) -> (i32, i32) {
    %c0_i32 = arith.constant 0 : i32
    %c0_i32_0 = arith.constant 0 : i32
    return %arg0, %c0_i32 : i32, i32
  }
}

module attributes {stable_mosaic.version = 11 : i64} {
  func.func @_bert_self_output_kernel(%arg0: i32, %arg1: memref<8x128xf32, #tpu.memory_space<vmem>>, %arg2: memref<8x128xf32, #tpu.memory_space<vmem>>, %arg3: memref<128x128xf32, #tpu.memory_space<vmem>>, %arg4: memref<3x128xf32, #tpu.memory_space<vmem>>, %arg5: memref<8x128xf32, #tpu.memory_space<vmem>>) attributes {dimension_semantics = [#tpu.dimension_semantics<parallel>], iteration_bounds = array<i64: 2>, scalar_prefetch = 0 : i64, scratch_operands = 0 : i64, tpu.core_type = #tpu.core_type<tc>, window_params = [{transform_indices = @transform_0, window_bounds = array<i64: 8, 128>}, {transform_indices = @transform_1, window_bounds = array<i64: 8, 128>}, {pipeline_mode = #tpu.pipeline_mode<synchronous>, transform_indices = @transform_2, window_bounds = array<i64: 128, 128>}, {pipeline_mode = #tpu.pipeline_mode<synchronous>, transform_indices = @transform_3, window_bounds = array<i64: 3, 128>}, {transform_indices = @transform_4, window_bounds = array<i64: 8, 128>}]} {
    %c0 = arith.constant 0 : index
    %c0_0 = arith.constant 0 : index
    %0 = vector.load %arg1[%c0, %c0_0] : memref<8x128xf32, #tpu.memory_space<vmem>>, vector<8x128xf32>
    %c0_1 = arith.constant 0 : index
    %c0_2 = arith.constant 0 : index
    %1 = vector.load %arg3[%c0_1, %c0_2] : memref<128x128xf32, #tpu.memory_space<vmem>>, vector<128x128xf32>
    %cst = arith.constant dense<0.000000e+00> : vector<8x128xf32>
    %2 = tpu.matmul %0, %1, %cst {dimension_numbers = #tpu.dot_dimension_numbers<[1], [0], [0], [1], [0, 0, 1, 1], [], []>} : vector<8x128xf32>, vector<128x128xf32>, vector<8x128xf32> -> vector<8x128xf32>
    %c0_3 = arith.constant 0 : index
    %c0_4 = arith.constant 0 : index
    %3 = vector.load %arg4[%c0_3, %c0_4] : memref<3x128xf32, #tpu.memory_space<vmem>>, vector<3x128xf32>
    %4 = vector.extract_strided_slice %3 {offsets = [0, 0], sizes = [1, 128], strides = [1, 1]} : vector<3x128xf32> to vector<1x128xf32>
    %5 = vector.extract_strided_slice %3 {offsets = [1, 0], sizes = [1, 128], strides = [1, 1]} : vector<3x128xf32> to vector<1x128xf32>
    %6 = vector.extract_strided_slice %3 {offsets = [2, 0], sizes = [1, 128], strides = [1, 1]} : vector<3x128xf32> to vector<1x128xf32>
    %7 = vector.broadcast %4 : vector<1x128xf32> to vector<8x128xf32>
    %8 = arith.addf %2, %7 : vector<8x128xf32>
    %c0_5 = arith.constant 0 : index
    %c0_6 = arith.constant 0 : index
    %9 = vector.load %arg2[%c0_5, %c0_6] : memref<8x128xf32, #tpu.memory_space<vmem>>, vector<8x128xf32>
    %10 = arith.addf %8, %9 : vector<8x128xf32>
    %cst_7 = arith.constant dense<0.000000e+00> : vector<8xf32>
    %11 = vector.multi_reduction <add>, %10, %cst_7 [1] : vector<8x128xf32> to vector<8xf32>
    %12 = vector.shape_cast %11 : vector<8xf32> to vector<8x1xf32>
    %cst_8 = arith.constant 7.812500e-03 : f32
    %13 = vector.broadcast %cst_8 : f32 to vector<8x1xf32>
    %14 = arith.mulf %12, %13 : vector<8x1xf32>
    %15 = vector.broadcast %14 : vector<8x1xf32> to vector<8x128xf32>
    %16 = arith.subf %10, %15 : vector<8x128xf32>
    %17 = arith.mulf %16, %16 : vector<8x128xf32>
    %cst_9 = arith.constant dense<0.000000e+00> : vector<8xf32>
    %18 = vector.multi_reduction <add>, %17, %cst_9 [1] : vector<8x128xf32> to vector<8xf32>
    %19 = vector.shape_cast %18 : vector<8xf32> to vector<8x1xf32>
    %cst_10 = arith.constant 7.812500e-03 : f32
    %20 = vector.broadcast %cst_10 : f32 to vector<8x1xf32>
    %21 = arith.mulf %19, %20 : vector<8x1xf32>
    %cst_11 = arith.constant 9.99999996E-13 : f32
    %22 = vector.broadcast %cst_11 : f32 to vector<8x1xf32>
    %23 = arith.addf %21, %22 : vector<8x1xf32>
    %24 = math.rsqrt %23 : vector<8x1xf32>
    %25 = vector.broadcast %24 : vector<8x1xf32> to vector<8x128xf32>
    %26 = arith.mulf %16, %25 : vector<8x128xf32>
    %27 = vector.broadcast %5 : vector<1x128xf32> to vector<8x128xf32>
    %28 = arith.mulf %27, %26 : vector<8x128xf32>
    %29 = vector.broadcast %6 : vector<1x128xf32> to vector<8x128xf32>
    %30 = arith.addf %28, %29 : vector<8x128xf32>
    %c0_12 = arith.constant 0 : index
    %c0_13 = arith.constant 0 : index
    %31 = vector.load %arg5[%c0_12, %c0_13] : memref<8x128xf32, #tpu.memory_space<vmem>>, vector<8x128xf32>
    tpu.vector_store %arg5[%c0_12, %c0_13], %30 {strides = array<i32>} : memref<8x128xf32, #tpu.memory_space<vmem>>, vector<8x128xf32>,
    return
  }
  func.func @transform_0(%arg0: i32) -> (i32, i32) {
    %c0_i32 = arith.constant 0 : i32
    %c0_i32_0 = arith.constant 0 : i32
    return %arg0, %c0_i32 : i32, i32
  }
  func.func @transform_1(%arg0: i32) -> (i32, i32) {
    %c0_i32 = arith.constant 0 : i32
    %c0_i32_0 = arith.constant 0 : i32
    return %arg0, %c0_i32 : i32, i32
  }
  func.func @transform_2(%arg0: i32) -> (i32, i32) {
    %c0_i32 = arith.constant 0 : i32
    %c0_i32_0 = arith.constant 0 : i32
    %c0_i32_1 = arith.constant 0 : i32
    return %c0_i32, %c0_i32_0 : i32, i32
  }
  func.func @transform_3(%arg0: i32) -> (i32, i32) {
    %c0_i32 = arith.constant 0 : i32
    %c0_i32_0 = arith.constant 0 : i32
    %c0_i32_1 = arith.constant 0 : i32
    return %c0_i32, %c0_i32_0 : i32, i32
  }
  func.func @transform_4(%arg0: i32) -> (i32, i32) {
    %c0_i32 = arith.constant 0 : i32
    %c0_i32_0 = arith.constant 0 : i32
    return %arg0, %c0_i32 : i32, i32
  }
}

</mosaic_0001>

<llo_original>
// kernel: _bert_self_output_core.1
$region0: #{_bert_self_output_core.1}
  #allocation0 [shape = 'u32[]', space=smem, size = 0x4, offset = 0x4, fixed_abs, tag = 'smem constant byte address 0x4 - core index']
  #allocation1 [shape = 'u32[144,128]{1,0:T(1,128)}', space=vmem, size = 0x12000, scoped, tag = 'internal scratch']
  %s0 = inlined_call_operand.hbm [shape: f32[16,128], index: 0, kind: input, shape index: {}]
  %s1 = inlined_call_operand.hbm [shape: f32[16,128], index: 1, kind: input, shape index: {}]
  %s2 = inlined_call_operand.hbm [shape: f32[128,128], index: 2, kind: input, shape index: {}]
  %s3 = inlined_call_operand.vmem [shape: f32[3,128], index: 3, kind: input, shape index: {}]
  %s4 = inlined_call_operand.hbm [shape: f32[16,128], index: 4, kind: output, shape index: {}]
  %s5 = sld [smem:[#allocation0]]
  $region61: #{_bert_self_output_core.1} parent=0
    _
  %s7 = ssub.s32 1, %s5
  %s8 = scalar_select 0, %s7, %s5
  $region1: #{_bert_self_output_core.1} parent=0
    #allocation2 [shape = 'u8[8192]{0}', space=vmem, size = 0x2000, scoped, tag = 'input window, operand 0']
    #allocation3 [shape = 's32[2]{0}', space=sflag, size = 0x8, scoped, tag = 'scoped memory for _bert_self_output_core.1']
    #allocation4 [shape = 's32[2]{0}', space=sflag, size = 0x8, scoped, tag = 'scoped memory for _bert_self_output_core.1']
    #allocation5 [shape = 'u8[8192]{0}', space=vmem, size = 0x2000, scoped, tag = 'input window, operand 1']
    #allocation6 [shape = 's32[2]{0}', space=sflag, size = 0x8, scoped, tag = 'scoped memory for _bert_self_output_core.1']
    #allocation7 [shape = 'u8[65536]{0}', space=vmem, size = 0x10000, scoped, tag = 'input window, operand 2, single buffered']
    #allocation8 [shape = 'u8[8192]{0}', space=vmem, size = 0x2000, scoped, tag = 'output window, operand 0']
    %9 = vsyncpa [#allocation3], 0
    %s10 = scalar_lea.sflag [#allocation3], 1
    %11 = vsyncpa %s10, 0
    %12 = vsyncpa [#allocation6], 0
    %s13 = scalar_lea.sflag [#allocation6], 1
    %14 = vsyncpa %s13, 0
    %15 = vsyncpa [#allocation4], 0
    %s16 = scalar_lea.sflag [#allocation4], 1
    %17 = vsyncpa %s16, 0
    loop: start=0, step=1, limit=4
    $region2: #{_bert_self_output_core.1} parent=1 // loop_pre_header
      _
    $region3: #{_bert_self_output_core.1} parent=1 // loop_header
      %s19 = sphi 0, %s23
      %p20 = scmp.ge.s32.totalorder %s19, 4
      %s29 = sphi 0, %s31
      %s32 = sphi 0, %s29
      %s33 = sphi 0, %s32
      %s49 = sphi 0, %s33
      %s55 = sphi 0, %s57
      %s58 = sphi 0, %s55
      %s59 = sphi 0, %s58
      %s75 = sphi 0, %s59
      %s79 = sphi 0, %s79
      %s81 = sphi 0, %s79
      %s82 = sphi 0, %s81
      %s96 = sphi 0, %s82
      %s100 = sphi 0, %s100
      %s102 = sphi 0, %s100
      %s103 = sphi 0, %s102
      %s117 = sphi 0, %s103
      %s123 = sphi 0, %s125
      %s126 = sphi 0, %s123
      %s127 = sphi 0, %s126
      %s143 = sphi 0, %s127
    $region4: #{_bert_self_output_core.1} parent=1 // loop_header_branch
      %22 = sbr.rel (%p20) target = $region8
    $region5: #{_bert_self_output_core.1} parent=1 // loop_body
      %s24 = ssub.s32 %s19, 1
      %s25 = ssub.s32 %s19, 2
      %s26 = sadd.s32 %s19, 1
      %s27 = ssub.s32 %s19, %s26
      %p28 = scmp.eq.s32.totalorder %s27, 0
      %s30 = sadd.s32 %s29, 1
      %s31 = scalar_select %p28, %s29, %s30
      %p34 = pneg %p28
      %p35 = scmp.eq.s32.totalorder %s19, 1
      %p36 = por %p34, %p35
      %p37 = scmp.ne.s32.totalorder %s29, %s32
      %p38 = scmp.eq.s32.totalorder %s19, 0
      %p39 = por %p37, %p38
      %p40 = scmp.ne.s32.totalorder %s29, %s32
      %p41 = scmp.eq.s32.totalorder %s24, 1
      %p42 = por %p40, %p41
      %p43 = scmp.ne.s32.totalorder %s32, %s33
      %p44 = scmp.eq.s32.totalorder %s24, 0
      %p45 = por %p43, %p44
      %p46 = scmp.ne.s32.totalorder %s32, %s33
      %p47 = scmp.eq.s32.totalorder %s25, 1
      %p48 = por %p46, %p47
      %p50 = scmp.ne.s32.totalorder %s33, %s49
      %p51 = scmp.eq.s32.totalorder %s25, 0
      %p52 = por %p50, %p51
      %s53 = ssub.s32 %s19, %s26
      %p54 = scmp.eq.s32.totalorder %s53, 0
      %s56 = sadd.s32 %s55, 1
      %s57 = scalar_select %p54, %s55, %s56
      %p60 = pneg %p54
      %p61 = scmp.eq.s32.totalorder %s19, 1
      %p62 = por %p60, %p61
      %p63 = scmp.ne.s32.totalorder %s55, %s58
      %p64 = scmp.eq.s32.totalorder %s19, 0
      %p65 = por %p63, %p64
      %p66 = scmp.ne.s32.totalorder %s55, %s58
      %p67 = scmp.eq.s32.totalorder %s24, 1
      %p68 = por %p66, %p67
      %p69 = scmp.ne.s32.totalorder %s58, %s59
      %p70 = scmp.eq.s32.totalorder %s24, 0
      %p71 = por %p69, %p70
      %p72 = scmp.ne.s32.totalorder %s58, %s59
      %p73 = scmp.eq.s32.totalorder %s25, 1
      %p74 = por %p72, %p73
      %p76 = scmp.ne.s32.totalorder %s59, %s75
      %p77 = scmp.eq.s32.totalorder %s25, 0
      %p78 = por %p76, %p77
      %s80 = sadd.s32 %s79, 1
      %p83 = scmp.eq.s32.totalorder %s19, 1
      %p84 = scmp.ne.s32.totalorder %s79, %s81
      %p85 = scmp.eq.s32.totalorder %s19, 0
      %p86 = por %p84, %p85
      %p87 = scmp.ne.s32.totalorder %s79, %s81
      %p88 = scmp.eq.s32.totalorder %s24, 1
      %p89 = por %p87, %p88
      %p90 = scmp.ne.s32.totalorder %s81, %s82
      %p91 = scmp.eq.s32.totalorder %s24, 0
      %p92 = por %p90, %p91
      %p93 = scmp.ne.s32.totalorder %s81, %s82
      %p94 = scmp.eq.s32.totalorder %s25, 1
      %p95 = por %p93, %p94
      %p97 = scmp.ne.s32.totalorder %s82, %s96
      %p98 = scmp.eq.s32.totalorder %s25, 0
      %p99 = por %p97, %p98
      %s101 = sadd.s32 %s100, 1
      %p104 = scmp.eq.s32.totalorder %s19, 1
      %p105 = scmp.ne.s32.totalorder %s100, %s102
      %p106 = scmp.eq.s32.totalorder %s19, 0
      %p107 = por %p105, %p106
      %p108 = scmp.ne.s32.totalorder %s100, %s102
      %p109 = scmp.eq.s32.totalorder %s24, 1
      %p110 = por %p108, %p109
      %p111 = scmp.ne.s32.totalorder %s102, %s103
      %p112 = scmp.eq.s32.totalorder %s24, 0
      %p113 = por %p111, %p112
      %p114 = scmp.ne.s32.totalorder %s102, %s103
      %p115 = scmp.eq.s32.totalorder %s25, 1
      %p116 = por %p114, %p115
      %p118 = scmp.ne.s32.totalorder %s103, %s117
      %p119 = scmp.eq.s32.totalorder %s25, 0
      %p120 = por %p118, %p119
      %s121 = ssub.s32 %s19, %s26
      %p122 = scmp.eq.s32.totalorder %s121, 0
      %s124 = sadd.s32 %s123, 1
      %s125 = scalar_select %p122, %s123, %s124
      %p128 = pneg %p122
      %p129 = scmp.eq.s32.totalorder %s19, 1
      %p130 = por %p128, %p129
      %p131 = scmp.ne.s32.totalorder %s123, %s126
      %p132 = scmp.eq.s32.totalorder %s19, 0
      %p133 = por %p131, %p132
      %p134 = scmp.ne.s32.totalorder %s123, %s126
      %p135 = scmp.eq.s32.totalorder %s24, 1
      %p136 = por %p134, %p135
      %p137 = scmp.ne.s32.totalorder %s126, %s127
      %p138 = scmp.eq.s32.totalorder %s24, 0
      %p139 = por %p137, %p138
      %p140 = scmp.ne.s32.totalorder %s126, %s127
      %p141 = scmp.eq.s32.totalorder %s25, 1
      %p142 = por %p140, %p141
      %p144 = scmp.ne.s32.totalorder %s127, %s143
      %p145 = scmp.eq.s32.totalorder %s25, 0
      %p146 = por %p144, %p145
      %p147 = scmp.le.s32.totalorder 1, %s19
      %p148 = scmp.lt.s32.totalorder %s19, 3
      %p149 = pnand %p147, %p148
      %p150 = pneg %p149
      // Predicated region
      $region9: #{_bert_self_output_core.1} parent=5 // pred_check
        _
      $region10: #{_bert_self_output_core.1} parent=5 // pred_check_branch
        %152 = sbr.rel (%p149) target = $region12
      $region11: #{_bert_self_output_core.1} parent=5 // pred_region
        %s153 = ssub.s32 %s19, 1
        // Predicated region
        $region13: #{_bert_self_output_core.1} parent=11 // pred_check
          %p154 = pneg %p92
        $region14: #{_bert_self_output_core.1} parent=11 // pred_check_branch
          %156 = sbr.rel (%p154) target = $region16
        $region15: #{_bert_self_output_core.1} parent=11 // pred_region
          %s158 = ssub.s32 2048, 2048
          %159 = vsyncadd [#allocation6], %s158
          %s160 = sshll.u32 [#allocation7], 4
          %s161 = int_to_ptr.vmem [resolvable:$true] %s160
          %166 = dma.hbm_to_vmem [thread:$0]  %s2, 2048, %s161, [#allocation6], 128, 128, 8
        $region16: #{_bert_self_output_core.1} parent=11 // pred_fallthru
          _
        // Predicated region
        $region17: #{_bert_self_output_core.1} parent=11 // pred_check
          %p167 = pneg %p113
        $region18: #{_bert_self_output_core.1} parent=11 // pred_check_branch
          %169 = sbr.rel (%p167) target = $region20
        $region19: #{_bert_self_output_core.1} parent=11 // pred_region
          _
        $region20: #{_bert_self_output_core.1} parent=11 // pred_fallthru
          _
      $region12: #{_bert_self_output_core.1} parent=5 // pred_fallthru
        _
      %p170 = scmp.lt.s32.totalorder %s19, 2
      // Predicated region
      $region21: #{_bert_self_output_core.1} parent=5 // pred_check
        %p171 = pneg %p170
      $region22: #{_bert_self_output_core.1} parent=5 // pred_check_branch
        %173 = sbr.rel (%p171) target = $region24
      $region23: #{_bert_self_output_core.1} parent=5 // pred_region
        // Predicated region
        $region25: #{_bert_self_output_core.1} parent=23 // pred_check
          %p174 = pneg %p39
        $region26: #{_bert_self_output_core.1} parent=23 // pred_check_branch
          %176 = sbr.rel (%p174) target = $region28
        $region27: #{_bert_self_output_core.1} parent=23 // pred_region
          %s177 = sand.u32 %s29, 1
          %s178 = scalar_lea.sflag [#allocation3], %s177
          %s179 = sand.u32 %s29, 1
          %s180 = smul.addr %s179, 8
          %s181 = scalar_lea.vmem [#allocation2], %s180
          %s183 = ssub.s32 128, 128
          %184 = vsyncadd %s178, %s183
          %s185 = smul.addr %s19, 128
          %s186 = scalar_lea.hbm %s0, %s185
          %s188 = sshll.u32 %s181, 4
          %s189 = int_to_ptr.vmem [resolvable:$true] %s188
          %191 = dma.hbm_to_vmem [thread:$0]  %s186, 128, %s189, %s178
        $region28: #{_bert_self_output_core.1} parent=23 // pred_fallthru
          _
        // Predicated region
        $region29: #{_bert_self_output_core.1} parent=23 // pred_check
          %p192 = pneg %p65
        $region30: #{_bert_self_output_core.1} parent=23 // pred_check_branch
          %194 = sbr.rel (%p192) target = $region32
        $region31: #{_bert_self_output_core.1} parent=23 // pred_region
          %s195 = sand.u32 %s19, 1
          %s196 = scalar_lea.sflag [#allocation6], %s195
          %s197 = sand.u32 %s55, 1
          %s198 = smul.addr %s197, 8
          %s199 = scalar_lea.vmem [#allocation5], %s198
          %s201 = ssub.s32 128, 128
          %202 = vsyncadd %s196, %s201
          %s203 = smul.addr %s19, 128
          %s204 = scalar_lea.hbm %s1, %s203
          %s206 = sshll.u32 %s199, 4
          %s207 = int_to_ptr.vmem [resolvable:$true] %s206
          %209 = dma.hbm_to_vmem [thread:$0]  %s204, 128, %s207, %s196
        $region32: #{_bert_self_output_core.1} parent=23 // pred_fallthru
          _
      $region24: #{_bert_self_output_core.1} parent=5 // pred_fallthru
        _
      %p210 = scmp.le.s32.totalorder 1, %s19
      %p211 = scmp.lt.s32.totalorder %s19, 3
      %p212 = pnand %p210, %p211
      %p213 = pneg %p212
      // Predicated region
      $region33: #{_bert_self_output_core.1} parent=5 // pred_check
        _
      $region34: #{_bert_self_output_core.1} parent=5 // pred_check_branch
        %215 = sbr.rel (%p212) target = $region36
      $region35: #{_bert_self_output_core.1} parent=5 // pred_region
        %s216 = ssub.s32 %s19, 1
        %s217 = sand.u32 %s32, 1
        %s218 = scalar_lea.sflag [#allocation3], %s217
        %s219 = sand.u32 %s32, 1
        %s220 = smul.addr %s219, 8
        %s221 = scalar_lea.vmem [#allocation2], %s220
        // Predicated region
        $region37: #{_bert_self_output_core.1} parent=35 // pred_check
          %p222 = pneg %p45
        $region38: #{_bert_self_output_core.1} parent=35 // pred_check_branch
          %224 = sbr.rel (%p222) target = $region40
        $region39: #{_bert_self_output_core.1} parent=35 // pred_region
          %225 = dma.done %s218, 128
        $region40: #{_bert_self_output_core.1} parent=35 // pred_fallthru
          _
        %s226 = sand.u32 %s24, 1
        %s227 = scalar_lea.sflag [#allocation6], %s226
        %s228 = sand.u32 %s58, 1
        %s229 = smul.addr %s228, 8
        %s230 = scalar_lea.vmem [#allocation5], %s229
        // Predicated region
        $region41: #{_bert_self_output_core.1} parent=35 // pred_check
          %p231 = pneg %p71
        $region42: #{_bert_self_output_core.1} parent=35 // pred_check_branch
          %233 = sbr.rel (%p231) target = $region44
        $region43: #{_bert_self_output_core.1} parent=35 // pred_region
          %234 = dma.done %s227, 128
        $region44: #{_bert_self_output_core.1} parent=35 // pred_fallthru
          _
        // Predicated region
        $region45: #{_bert_self_output_core.1} parent=35 // pred_check
          %p235 = pneg %p92
        $region46: #{_bert_self_output_core.1} parent=35 // pred_check_branch
          %237 = sbr.rel (%p235) target = $region48
        $region47: #{_bert_self_output_core.1} parent=35 // pred_region
          %238 = dma.done [#allocation6], 2048
        $region48: #{_bert_self_output_core.1} parent=35 // pred_fallthru
          _
        %s239 = sand.u32 %s32, 1
        %s240 = scalar_lea.sflag [#allocation3], %s239
        %s241 = sand.u32 %s32, 1
        %s242 = smul.addr %s241, 8
        %s243 = scalar_lea.vmem [#allocation2], %s242
        %p244 = pneg %p45
        %p245 = pneg %p42
        %s246 = sand.u32 %s24, 1
        %s247 = scalar_lea.sflag [#allocation6], %s246
        %s248 = sand.u32 %s58, 1
        %s249 = smul.addr %s248, 8
        %s250 = scalar_lea.vmem [#allocation5], %s249
        %p251 = pneg %p71
        %p252 = pneg %p68
        %p253 = pneg %p92
        %p254 = pneg %p89
        %p255 = pneg %p113
        %p256 = pneg %p110
        %p257 = pneg %p139
        %p258 = pneg %p136
        %s259 = sand.u32 %s126, 1
        %s260 = scalar_lea.sflag [#allocation4], %s259
        %s261 = sand.u32 %s126, 1
        %s262 = smul.addr %s261, 8
        %s263 = scalar_lea.vmem [#allocation8], %s262
        %v264 = vld [vmem:[%s221] sm:$0xff]
        %v265 = vld [vmem:[#allocation7] sm:$0xff]
        %v266 = vld [vmem:[#allocation7 + $0x8] sm:$0xff]
        %v267 = vld [vmem:[#allocation7 + $0x10] sm:$0xff]
        %v268 = vld [vmem:[#allocation7 + $0x18] sm:$0xff]
        %v269 = vld [vmem:[#allocation7 + $0x20] sm:$0xff]
        %v270 = vld [vmem:[#allocation7 + $0x28] sm:$0xff]
        %v271 = vld [vmem:[#allocation7 + $0x30] sm:$0xff]
        %v272 = vld [vmem:[#allocation7 + $0x38] sm:$0xff]
        %v273 = vld [vmem:[#allocation7 + $0x40] sm:$0xff]
        %v274 = vld [vmem:[#allocation7 + $0x48] sm:$0xff]
        %v275 = vld [vmem:[#allocation7 + $0x50] sm:$0xff]
        %v276 = vld [vmem:[#allocation7 + $0x58] sm:$0xff]
        %v277 = vld [vmem:[#allocation7 + $0x60] sm:$0xff]
        %v278 = vld [vmem:[#allocation7 + $0x68] sm:$0xff]
        %v279 = vld [vmem:[#allocation7 + $0x70] sm:$0xff]
        %v280 = vld [vmem:[#allocation7 + $0x78] sm:$0xff]
        %v281 = vld [vmem:[%s3] sm:$0x7]
        %v282 = vlaneseq
        %v283 = vshrl.u32 %v282, 7
        %v284 = vsub.s32 0, %v283
        %v285 = vrot.slane %v281, %v284
        %286 = vmatprep.subr.mxu0 0.0
        %287 = vmatpush1.msra.mxu0 %v265
        %288 = vmatprep.subr.mxu0 0.0
        %289 = vmatpush1.msra.mxu0 %v266
        %290 = vmatprep.subr.mxu0 0.0
        %291 = vmatpush1.msra.mxu0 %v267
        %292 = vmatprep.subr.mxu0 0.0
        %293 = vmatpush1.msra.mxu0 %v268
        %294 = vmatprep.subr.mxu0 0.0
        %295 = vmatpush1.msra.mxu0 %v269
        %296 = vmatprep.subr.mxu0 0.0
        %297 = vmatpush1.msra.mxu0 %v270
        %298 = vmatprep.subr.mxu0 0.0
        %299 = vmatpush1.msra.mxu0 %v271
        %300 = vmatprep.subr.mxu0 0.0
        %301 = vmatpush1.msra.mxu0 %v272
        %302 = vmatprep.subr.mxu0 0.0
        %303 = vmatpush1.msra.mxu0 %v273
        %304 = vmatprep.subr.mxu0 0.0
        %305 = vmatpush1.msra.mxu0 %v274
        %306 = vmatprep.subr.mxu0 0.0
        %307 = vmatpush1.msra.mxu0 %v275
        %308 = vmatprep.subr.mxu0 0.0
        %309 = vmatpush1.msra.mxu0 %v276
        %310 = vmatprep.subr.mxu0 0.0
        %311 = vmatpush1.msra.mxu0 %v277
        %312 = vmatprep.subr.mxu0 0.0
        %313 = vmatpush1.msra.mxu0 %v278
        %314 = vmatprep.subr.mxu0 0.0
        %315 = vmatpush1.msra.mxu0 %v279
        %316 = vmatprep.subr.mxu0 0.0
        %317 = vmatpush1.msra.mxu0 %v280
        %318 = vmatprep.subr.mxu0 0.0
        %319 = vmatpush1.msra.mxu0 0.0
        %320 = vmatprep.subr.mxu0 0.0
        %321 = vmatpush1.msra.mxu0 0.0
        %322 = vmatprep.subr.mxu0 0.0
        %323 = vmatpush1.msra.mxu0 0.0
        %324 = vmatprep.subr.mxu0 0.0
        %325 = vmatpush1.msra.mxu0 0.0
        %326 = vmatprep.subr.mxu0 0.0
        %327 = vmatpush1.msra.mxu0 0.0
        %328 = vmatprep.subr.mxu0 0.0
        %329 = vmatpush1.msra.mxu0 0.0
        %330 = vmatprep.subr.mxu0 0.0
        %331 = vmatpush1.msra.mxu0 0.0
        %332 = vmatprep.subr.mxu0 0.0
        %333 = vmatpush1.msra.mxu0 0.0
        %334 = vmatprep.subr.mxu0 0.0
        %335 = vmatpush1.msra.mxu0 0.0
        %336 = vmatprep.subr.mxu0 0.0
        %337 = vmatpush1.msra.mxu0 0.0
        %338 = vmatprep.subr.mxu0 0.0
        %339 = vmatpush1.msra.mxu0 0.0
        %340 = vmatprep.subr.mxu0 0.0
        %341 = vmatpush1.msra.mxu0 0.0
        %342 = vmatprep.subr.mxu0 0.0
        %343 = vmatpush1.msra.mxu0 0.0
        %344 = vmatprep.subr.mxu0 0.0
        %345 = vmatpush1.msra.mxu0 0.0
        %346 = vmatprep.subr.mxu0 0.0
        %347 = vmatpush1.msra.mxu0 0.0
        %348 = vmatprep.subr.mxu0 0.0
        %349 = vmatpush1.msra.mxu0 0.0
        %350 = vmatprep.mubr.f32.mxu0 0.0
        %351 = vmatmul.mubr.f32.gmra.mrb[0].mxu0 %v264
        %v352 = vpop.f32.mrb[0].mxu0
        %v353 = vadd.f32 %v285, %v352
        %v354 = vpop.f32.mrb[0].mxu0
        %355 = vdwg.mxu0
        %v356 = vld [vmem:[%s230] sm:$0xff]
        %v357 = vadd.f32 %v353, %v356
        %358 = vadd.xlane.f32.xlu0 %v357
        %v359 = vpop.xlane.xlu0 %358
        %v360 = vmul.f32 %v359, 0.0078125
        %v361 = vsub.f32 %v357, %v360
        %v362 = vmul.f32 %v361, %v361
        %363 = vadd.xlane.f32.xlu0 %v362
        %v364 = vpop.xlane.xlu0 %363
        %v365 = vmul.f32 %v364, 0.0078125
        %v366 = vadd.f32 %v365, 1e-12
        %v367 = vrsqrt.pop %v366
        %v368 = vmul.f32 %v361, %v367
        %v369 = vlaneseq
        %v370 = vshrl.u32 %v369, 7
        %v371 = vsub.s32 1, %v370
        %v372 = vrot.slane %v281, %v371
        %v373 = vmul.f32 %v372, %v368
        %v374 = vlaneseq
        %v375 = vshrl.u32 %v374, 7
        %v376 = vsub.s32 2, %v375
        %v377 = vrot.slane %v281, %v376
        %v378 = vadd.f32 %v373, %v377
        %379 = vst [vmem:[%s263] sm:$0xff] %v378
        %s380 = sand.u32 %s126, 1
        %s381 = scalar_lea.sflag [#allocation4], %s380
        %s382 = sand.u32 %s126, 1
        %s383 = smul.addr %s382, 8
        %s384 = scalar_lea.vmem [#allocation8], %s383
        // Predicated region
        $region49: #{_bert_self_output_core.1} parent=35 // pred_check
          %p385 = pneg %p136
        $region50: #{_bert_self_output_core.1} parent=35 // pred_check_branch
          %387 = sbr.rel (%p385) target = $region52
        $region51: #{_bert_self_output_core.1} parent=35 // pred_region
          %s389 = ssub.s32 128, 128
          %390 = vsyncadd %s381, %s389
          %s391 = smul.addr %s24, 128
          %s392 = scalar_lea.hbm %s4, %s391
          %s394 = sshll.u32 %s384, 4
          %s395 = int_to_ptr.vmem [resolvable:$true] %s394
          %397 = dma.vmem_to_hbm [thread:$0]  %s395, 128, %s392, %s381
        $region52: #{_bert_self_output_core.1} parent=35 // pred_fallthru
          _
      $region36: #{_bert_self_output_core.1} parent=5 // pred_fallthru
        _
      %p398 = scmp.le.s32.totalorder 2, %s19
      // Predicated region
      $region53: #{_bert_self_output_core.1} parent=5 // pred_check
        %p399 = pneg %p398
      $region54: #{_bert_self_output_core.1} parent=5 // pred_check_branch
        %401 = sbr.rel (%p399) target = $region56
      $region55: #{_bert_self_output_core.1} parent=5 // pred_region
        %s402 = ssub.s32 %s19, 2
        // Predicated region
        $region57: #{_bert_self_output_core.1} parent=55 // pred_check
          %p403 = pneg %p142
        $region58: #{_bert_self_output_core.1} parent=55 // pred_check_branch
          %405 = sbr.rel (%p403) target = $region60
        $region59: #{_bert_self_output_core.1} parent=55 // pred_region
          %s406 = sand.u32 %s127, 1
          %s407 = scalar_lea.sflag [#allocation4], %s406
          %s408 = sand.u32 %s127, 1
          %s409 = smul.addr %s408, 8
          %s410 = scalar_lea.vmem [#allocation8], %s409
          %411 = dma.done %s407, 128
        $region60: #{_bert_self_output_core.1} parent=55 // pred_fallthru
          _
      $region56: #{_bert_self_output_core.1} parent=5 // pred_fallthru
        _
    $region6: #{_bert_self_output_core.1} parent=1 // loop_footer
      %s23 = sadd.s32 1, %s19
    $region7: #{_bert_self_output_core.1} parent=1 // loop_footer_branch
      %18 = sbr.rel target = $region3
    $region8: #{_bert_self_output_core.1} parent=1 // loop_exit
      _
    %412 = vsyncpa [#allocation3], 1
    %s413 = scalar_lea.sflag [#allocation3], 1
    %414 = vsyncpa %s413, 1
    %415 = vsyncpa [#allocation6], 1
    %s416 = scalar_lea.sflag [#allocation6], 1
    %417 = vsyncpa %s416, 1
    %418 = vsyncpa [#allocation4], 1
    %s419 = scalar_lea.sflag [#allocation4], 1
    %420 = vsyncpa %s419, 1

// kernel: _bert_self_output_core.1
$region0: #{_bert_self_output_core.1}
  #allocation0 [shape = 'u32[]', space=smem, size = 0x4, offset = 0x4, fixed_abs, tag = 'smem constant byte address 0x4 - core index']
  #allocation1 [shape = 'u32[144,128]{1,0:T(1,128)}', space=vmem, size = 0x12000, scoped, tag = 'internal scratch']
  %s0 = inlined_call_operand.hbm [shape: f32[16,128], index: 0, kind: input, shape index: {}]
  %s1 = inlined_call_operand.hbm [shape: f32[16,128], index: 1, kind: input, shape index: {}]
  %s2 = inlined_call_operand.hbm [shape: f32[128,128], index: 2, kind: input, shape index: {}]
  %s3 = inlined_call_operand.vmem [shape: f32[3,128], index: 3, kind: input, shape index: {}]
  %s4 = inlined_call_operand.hbm [shape: f32[16,128], index: 4, kind: output, shape index: {}]
  %s5 = sld [smem:[#allocation0]]
  $region61: #{_bert_self_output_core.1} parent=0
    _
  %s7 = ssub.s32 1, %s5
  %s8 = scalar_select 0, %s7, %s5
  $region1: #{_bert_self_output_core.1} parent=0
    #allocation2 [shape = 'u8[8192]{0}', space=vmem, size = 0x2000, scoped, tag = 'input window, operand 0']
    #allocation3 [shape = 's32[2]{0}', space=sflag, size = 0x8, scoped, tag = 'scoped memory for _bert_self_output_core.1']
    #allocation4 [shape = 's32[2]{0}', space=sflag, size = 0x8, scoped, tag = 'scoped memory for _bert_self_output_core.1']
    #allocation5 [shape = 'u8[8192]{0}', space=vmem, size = 0x2000, scoped, tag = 'input window, operand 1']
    #allocation6 [shape = 's32[2]{0}', space=sflag, size = 0x8, scoped, tag = 'scoped memory for _bert_self_output_core.1']
    #allocation7 [shape = 'u8[65536]{0}', space=vmem, size = 0x10000, scoped, tag = 'input window, operand 2, single buffered']
    #allocation8 [shape = 'u8[8192]{0}', space=vmem, size = 0x2000, scoped, tag = 'output window, operand 0']
    %9 = vsyncpa [#allocation3], 0
    %s10 = scalar_lea.sflag [#allocation3], 1
    %11 = vsyncpa %s10, 0
    %12 = vsyncpa [#allocation6], 0
    %s13 = scalar_lea.sflag [#allocation6], 1
    %14 = vsyncpa %s13, 0
    %15 = vsyncpa [#allocation4], 0
    %s16 = scalar_lea.sflag [#allocation4], 1
    %17 = vsyncpa %s16, 0
    loop: start=0, step=1, limit=4
    $region2: #{_bert_self_output_core.1} parent=1 // loop_pre_header
      _
    $region3: #{_bert_self_output_core.1} parent=1 // loop_header
      %s19 = sphi 0, %s23
      %p20 = scmp.ge.s32.totalorder %s19, 4
      %s29 = sphi 0, %s31
      %s32 = sphi 0, %s29
      %s33 = sphi 0, %s32
      %s49 = sphi 0, %s33
      %s55 = sphi 0, %s57
      %s58 = sphi 0, %s55
      %s59 = sphi 0, %s58
      %s75 = sphi 0, %s59
      %s79 = sphi 0, %s79
      %s81 = sphi 0, %s79
      %s82 = sphi 0, %s81
      %s96 = sphi 0, %s82
      %s100 = sphi 0, %s100
      %s102 = sphi 0, %s100
      %s103 = sphi 0, %s102
      %s117 = sphi 0, %s103
      %s123 = sphi 0, %s125
      %s126 = sphi 0, %s123
      %s127 = sphi 0, %s126
      %s143 = sphi 0, %s127
    $region4: #{_bert_self_output_core.1} parent=1 // loop_header_branch
      %22 = sbr.rel (%p20) target = $region8
    $region5: #{_bert_self_output_core.1} parent=1 // loop_body
      %s24 = ssub.s32 %s19, 1
      %s25 = ssub.s32 %s19, 2
      %s26 = sadd.s32 %s19, 1
      %s27 = ssub.s32 %s19, %s26
      %p28 = scmp.eq.s32.totalorder %s27, 0
      %s30 = sadd.s32 %s29, 1
      %s31 = scalar_select %p28, %s29, %s30
      %p34 = pneg %p28
      %p35 = scmp.eq.s32.totalorder %s19, 1
      %p36 = por %p34, %p35
      %p37 = scmp.ne.s32.totalorder %s29, %s32
      %p38 = scmp.eq.s32.totalorder %s19, 0
      %p39 = por %p37, %p38
      %p40 = scmp.ne.s32.totalorder %s29, %s32
      %p41 = scmp.eq.s32.totalorder %s24, 1
      %p42 = por %p40, %p41
      %p43 = scmp.ne.s32.totalorder %s32, %s33
      %p44 = scmp.eq.s32.totalorder %s24, 0
      %p45 = por %p43, %p44
      %p46 = scmp.ne.s32.totalorder %s32, %s33
      %p47 = scmp.eq.s32.totalorder %s25, 1
      %p48 = por %p46, %p47
      %p50 = scmp.ne.s32.totalorder %s33, %s49
      %p51 = scmp.eq.s32.totalorder %s25, 0
      %p52 = por %p50, %p51
      %s53 = ssub.s32 %s19, %s26
      %p54 = scmp.eq.s32.totalorder %s53, 0
      %s56 = sadd.s32 %s55, 1
      %s57 = scalar_select %p54, %s55, %s56
      %p60 = pneg %p54
      %p61 = scmp.eq.s32.totalorder %s19, 1
      %p62 = por %p60, %p61
      %p63 = scmp.ne.s32.totalorder %s55, %s58
      %p64 = scmp.eq.s32.totalorder %s19, 0
      %p65 = por %p63, %p64
      %p66 = scmp.ne.s32.totalorder %s55, %s58
      %p67 = scmp.eq.s32.totalorder %s24, 1
      %p68 = por %p66, %p67
      %p69 = scmp.ne.s32.totalorder %s58, %s59
      %p70 = scmp.eq.s32.totalorder %s24, 0
      %p71 = por %p69, %p70
      %p72 = scmp.ne.s32.totalorder %s58, %s59
      %p73 = scmp.eq.s32.totalorder %s25, 1
      %p74 = por %p72, %p73
      %p76 = scmp.ne.s32.totalorder %s59, %s75
      %p77 = scmp.eq.s32.totalorder %s25, 0
      %p78 = por %p76, %p77
      %s80 = sadd.s32 %s79, 1
      %p83 = scmp.eq.s32.totalorder %s19, 1
      %p84 = scmp.ne.s32.totalorder %s79, %s81
      %p85 = scmp.eq.s32.totalorder %s19, 0
      %p86 = por %p84, %p85
      %p87 = scmp.ne.s32.totalorder %s79, %s81
      %p88 = scmp.eq.s32.totalorder %s24, 1
      %p89 = por %p87, %p88
      %p90 = scmp.ne.s32.totalorder %s81, %s82
      %p91 = scmp.eq.s32.totalorder %s24, 0
      %p92 = por %p90, %p91
      %p93 = scmp.ne.s32.totalorder %s81, %s82
      %p94 = scmp.eq.s32.totalorder %s25, 1
      %p95 = por %p93, %p94
      %p97 = scmp.ne.s32.totalorder %s82, %s96
      %p98 = scmp.eq.s32.totalorder %s25, 0
      %p99 = por %p97, %p98
      %s101 = sadd.s32 %s100, 1
      %p104 = scmp.eq.s32.totalorder %s19, 1
      %p105 = scmp.ne.s32.totalorder %s100, %s102
      %p106 = scmp.eq.s32.totalorder %s19, 0
      %p107 = por %p105, %p106
      %p108 = scmp.ne.s32.totalorder %s100, %s102
      %p109 = scmp.eq.s32.totalorder %s24, 1
      %p110 = por %p108, %p109
      %p111 = scmp.ne.s32.totalorder %s102, %s103
      %p112 = scmp.eq.s32.totalorder %s24, 0
      %p113 = por %p111, %p112
      %p114 = scmp.ne.s32.totalorder %s102, %s103
      %p115 = scmp.eq.s32.totalorder %s25, 1
      %p116 = por %p114, %p115
      %p118 = scmp.ne.s32.totalorder %s103, %s117
      %p119 = scmp.eq.s32.totalorder %s25, 0
      %p120 = por %p118, %p119
      %s121 = ssub.s32 %s19, %s26
      %p122 = scmp.eq.s32.totalorder %s121, 0
      %s124 = sadd.s32 %s123, 1
      %s125 = scalar_select %p122, %s123, %s124
      %p128 = pneg %p122
      %p129 = scmp.eq.s32.totalorder %s19, 1
      %p130 = por %p128, %p129
      %p131 = scmp.ne.s32.totalorder %s123, %s126
      %p132 = scmp.eq.s32.totalorder %s19, 0
      %p133 = por %p131, %p132
      %p134 = scmp.ne.s32.totalorder %s123, %s126
      %p135 = scmp.eq.s32.totalorder %s24, 1
      %p136 = por %p134, %p135
      %p137 = scmp.ne.s32.totalorder %s126, %s127
      %p138 = scmp.eq.s32.totalorder %s24, 0
      %p139 = por %p137, %p138
      %p140 = scmp.ne.s32.totalorder %s126, %s127
      %p141 = scmp.eq.s32.totalorder %s25, 1
      %p142 = por %p140, %p141
      %p144 = scmp.ne.s32.totalorder %s127, %s143
      %p145 = scmp.eq.s32.totalorder %s25, 0
      %p146 = por %p144, %p145
      %p147 = scmp.le.s32.totalorder 1, %s19
      %p148 = scmp.lt.s32.totalorder %s19, 3
      %p149 = pnand %p147, %p148
      %p150 = pneg %p149
      // Predicated region
      $region9: #{_bert_self_output_core.1} parent=5 // pred_check
        _
      $region10: #{_bert_self_output_core.1} parent=5 // pred_check_branch
        %152 = sbr.rel (%p149) target = $region12
      $region11: #{_bert_self_output_core.1} parent=5 // pred_region
        %s153 = ssub.s32 %s19, 1
        // Predicated region
        $region13: #{_bert_self_output_core.1} parent=11 // pred_check
          %p154 = pneg %p92
        $region14: #{_bert_self_output_core.1} parent=11 // pred_check_branch
          %156 = sbr.rel (%p154) target = $region16
        $region15: #{_bert_self_output_core.1} parent=11 // pred_region
          %s158 = ssub.s32 2048, 2048
          %159 = vsyncadd [#allocation6], %s158
          %s160 = sshll.u32 [#allocation7], 4
          %s161 = int_to_ptr.vmem [resolvable:$true] %s160
          %166 = dma.hbm_to_vmem [thread:$0]  %s2, 2048, %s161, [#allocation6], 128, 128, 8
        $region16: #{_bert_self_output_core.1} parent=11 // pred_fallthru
          _
        // Predicated region
        $region17: #{_bert_self_output_core.1} parent=11 // pred_check
          %p167 = pneg %p113
        $region18: #{_bert_self_output_core.1} parent=11 // pred_check_branch
          %169 = sbr.rel (%p167) target = $region20
        $region19: #{_bert_self_output_core.1} parent=11 // pred_region
          _
        $region20: #{_bert_self_output_core.1} parent=11 // pred_fallthru
          _
      $region12: #{_bert_self_output_core.1} parent=5 // pred_fallthru
        _
      %p170 = scmp.lt.s32.totalorder %s19, 2
      // Predicated region
      $region21: #{_bert_self_output_core.1} parent=5 // pred_check
        %p171 = pneg %p170
      $region22: #{_bert_self_output_core.1} parent=5 // pred_check_branch
        %173 = sbr.rel (%p171) target = $region24
      $region23: #{_bert_self_output_core.1} parent=5 // pred_region
        // Predicated region
        $region25: #{_bert_self_output_core.1} parent=23 // pred_check
          %p174 = pneg %p39
        $region26: #{_bert_self_output_core.1} parent=23 // pred_check_branch
          %176 = sbr.rel (%p174) target = $region28
        $region27: #{_bert_self_output_core.1} parent=23 // pred_region
          %s177 = sand.u32 %s29, 1
          %s178 = scalar_lea.sflag [#allocation3], %s177
          %s179 = sand.u32 %s29, 1
          %s180 = smul.addr %s179, 8
          %s181 = scalar_lea.vmem [#allocation2], %s180
          %s183 = ssub.s32 128, 128
          %184 = vsyncadd %s178, %s183
          %s185 = smul.addr %s19, 128
          %s186 = scalar_lea.hbm %s0, %s185
          %s188 = sshll.u32 %s181, 4
          %s189 = int_to_ptr.vmem [resolvable:$true] %s188
          %191 = dma.hbm_to_vmem [thread:$0]  %s186, 128, %s189, %s178
        $region28: #{_bert_self_output_core.1} parent=23 // pred_fallthru
          _
        // Predicated region
        $region29: #{_bert_self_output_core.1} parent=23 // pred_check
          %p192 = pneg %p65
        $region30: #{_bert_self_output_core.1} parent=23 // pred_check_branch
          %194 = sbr.rel (%p192) target = $region32
        $region31: #{_bert_self_output_core.1} parent=23 // pred_region
          %s195 = sand.u32 %s19, 1
          %s196 = scalar_lea.sflag [#allocation6], %s195
          %s197 = sand.u32 %s55, 1
          %s198 = smul.addr %s197, 8
          %s199 = scalar_lea.vmem [#allocation5], %s198
          %s201 = ssub.s32 128, 128
          %202 = vsyncadd %s196, %s201
          %s203 = smul.addr %s19, 128
          %s204 = scalar_lea.hbm %s1, %s203
          %s206 = sshll.u32 %s199, 4
          %s207 = int_to_ptr.vmem [resolvable:$true] %s206
          %209 = dma.hbm_to_vmem [thread:$0]  %s204, 128, %s207, %s196
        $region32: #{_bert_self_output_core.1} parent=23 // pred_fallthru
          _
      $region24: #{_bert_self_output_core.1} parent=5 // pred_fallthru
        _
      %p210 = scmp.le.s32.totalorder 1, %s19
      %p211 = scmp.lt.s32.totalorder %s19, 3
      %p212 = pnand %p210, %p211
      %p213 = pneg %p212
      // Predicated region
      $region33: #{_bert_self_output_core.1} parent=5 // pred_check
        _
      $region34: #{_bert_self_output_core.1} parent=5 // pred_check_branch
        %215 = sbr.rel (%p212) target = $region36
      $region35: #{_bert_self_output_core.1} parent=5 // pred_region
        %s216 = ssub.s32 %s19, 1
        %s217 = sand.u32 %s32, 1
        %s218 = scalar_lea.sflag [#allocation3], %s217
        %s219 = sand.u32 %s32, 1
        %s220 = smul.addr %s219, 8
        %s221 = scalar_lea.vmem [#allocation2], %s220
        // Predicated region
        $region37: #{_bert_self_output_core.1} parent=35 // pred_check
          %p222 = pneg %p45
        $region38: #{_bert_self_output_core.1} parent=35 // pred_check_branch
          %224 = sbr.rel (%p222) target = $region40
        $region39: #{_bert_self_output_core.1} parent=35 // pred_region
          %225 = dma.done %s218, 128
        $region40: #{_bert_self_output_core.1} parent=35 // pred_fallthru
          _
        %s226 = sand.u32 %s24, 1
        %s227 = scalar_lea.sflag [#allocation6], %s226
        %s228 = sand.u32 %s58, 1
        %s229 = smul.addr %s228, 8
        %s230 = scalar_lea.vmem [#allocation5], %s229
        // Predicated region
        $region41: #{_bert_self_output_core.1} parent=35 // pred_check
          %p231 = pneg %p71
        $region42: #{_bert_self_output_core.1} parent=35 // pred_check_branch
          %233 = sbr.rel (%p231) target = $region44
        $region43: #{_bert_self_output_core.1} parent=35 // pred_region
          %234 = dma.done %s227, 128
        $region44: #{_bert_self_output_core.1} parent=35 // pred_fallthru
          _
        // Predicated region
        $region45: #{_bert_self_output_core.1} parent=35 // pred_check
          %p235 = pneg %p92
        $region46: #{_bert_self_output_core.1} parent=35 // pred_check_branch
          %237 = sbr.rel (%p235) target = $region48
        $region47: #{_bert_self_output_core.1} parent=35 // pred_region
          %238 = dma.done [#allocation6], 2048
        $region48: #{_bert_self_output_core.1} parent=35 // pred_fallthru
          _
        %s239 = sand.u32 %s32, 1
        %s240 = scalar_lea.sflag [#allocation3], %s239
        %s241 = sand.u32 %s32, 1
        %s242 = smul.addr %s241, 8
        %s243 = scalar_lea.vmem [#allocation2], %s242
        %p244 = pneg %p45
        %p245 = pneg %p42
        %s246 = sand.u32 %s24, 1
        %s247 = scalar_lea.sflag [#allocation6], %s246
        %s248 = sand.u32 %s58, 1
        %s249 = smul.addr %s248, 8
        %s250 = scalar_lea.vmem [#allocation5], %s249
        %p251 = pneg %p71
        %p252 = pneg %p68
        %p253 = pneg %p92
        %p254 = pneg %p89
        %p255 = pneg %p113
        %p256 = pneg %p110
        %p257 = pneg %p139
        %p258 = pneg %p136
        %s259 = sand.u32 %s126, 1
        %s260 = scalar_lea.sflag [#allocation4], %s259
        %s261 = sand.u32 %s126, 1
        %s262 = smul.addr %s261, 8
        %s263 = scalar_lea.vmem [#allocation8], %s262
        %v264 = vld [vmem:[%s221] sm:$0xff]
        %v265 = vld [vmem:[#allocation7] sm:$0xff]
        %v266 = vld [vmem:[#allocation7 + $0x8] sm:$0xff]
        %v267 = vld [vmem:[#allocation7 + $0x10] sm:$0xff]
        %v268 = vld [vmem:[#allocation7 + $0x18] sm:$0xff]
        %v269 = vld [vmem:[#allocation7 + $0x20] sm:$0xff]
        %v270 = vld [vmem:[#allocation7 + $0x28] sm:$0xff]
        %v271 = vld [vmem:[#allocation7 + $0x30] sm:$0xff]
        %v272 = vld [vmem:[#allocation7 + $0x38] sm:$0xff]
        %v273 = vld [vmem:[#allocation7 + $0x40] sm:$0xff]
        %v274 = vld [vmem:[#allocation7 + $0x48] sm:$0xff]
        %v275 = vld [vmem:[#allocation7 + $0x50] sm:$0xff]
        %v276 = vld [vmem:[#allocation7 + $0x58] sm:$0xff]
        %v277 = vld [vmem:[#allocation7 + $0x60] sm:$0xff]
        %v278 = vld [vmem:[#allocation7 + $0x68] sm:$0xff]
        %v279 = vld [vmem:[#allocation7 + $0x70] sm:$0xff]
        %v280 = vld [vmem:[#allocation7 + $0x78] sm:$0xff]
        %v281 = vld [vmem:[%s3] sm:$0x7]
        %v282 = vlaneseq
        %v283 = vshrl.u32 %v282, 7
        %v284 = vsub.s32 0, %v283
        %v285 = vrot.slane %v281, %v284
        %286 = vmatprep.subr.mxu0 0.0
        %287 = vmatpush1.msra.mxu0 %v265
        %288 = vmatprep.subr.mxu0 0.0
        %289 = vmatpush1.msra.mxu0 %v266
        %290 = vmatprep.subr.mxu0 0.0
        %291 = vmatpush1.msra.mxu0 %v267
        %292 = vmatprep.subr.mxu0 0.0
        %293 = vmatpush1.msra.mxu0 %v268
        %294 = vmatprep.subr.mxu0 0.0
        %295 = vmatpush1.msra.mxu0 %v269
        %296 = vmatprep.subr.mxu0 0.0
        %297 = vmatpush1.msra.mxu0 %v270
        %298 = vmatprep.subr.mxu0 0.0
        %299 = vmatpush1.msra.mxu0 %v271
        %300 = vmatprep.subr.mxu0 0.0
        %301 = vmatpush1.msra.mxu0 %v272
        %302 = vmatprep.subr.mxu0 0.0
        %303 = vmatpush1.msra.mxu0 %v273
        %304 = vmatprep.subr.mxu0 0.0
        %305 = vmatpush1.msra.mxu0 %v274
        %306 = vmatprep.subr.mxu0 0.0
        %307 = vmatpush1.msra.mxu0 %v275
        %308 = vmatprep.subr.mxu0 0.0
        %309 = vmatpush1.msra.mxu0 %v276
        %310 = vmatprep.subr.mxu0 0.0
        %311 = vmatpush1.msra.mxu0 %v277
        %312 = vmatprep.subr.mxu0 0.0
        %313 = vmatpush1.msra.mxu0 %v278
        %314 = vmatprep.subr.mxu0 0.0
        %315 = vmatpush1.msra.mxu0 %v279
        %316 = vmatprep.subr.mxu0 0.0
        %317 = vmatpush1.msra.mxu0 %v280
        %318 = vmatprep.subr.mxu0 0.0
        %319 = vmatpush1.msra.mxu0 0.0
        %320 = vmatprep.subr.mxu0 0.0
        %321 = vmatpush1.msra.mxu0 0.0
        %322 = vmatprep.subr.mxu0 0.0
        %323 = vmatpush1.msra.mxu0 0.0
        %324 = vmatprep.subr.mxu0 0.0
        %325 = vmatpush1.msra.mxu0 0.0
        %326 = vmatprep.subr.mxu0 0.0
        %327 = vmatpush1.msra.mxu0 0.0
        %328 = vmatprep.subr.mxu0 0.0
        %329 = vmatpush1.msra.mxu0 0.0
        %330 = vmatprep.subr.mxu0 0.0
        %331 = vmatpush1.msra.mxu0 0.0
        %332 = vmatprep.subr.mxu0 0.0
        %333 = vmatpush1.msra.mxu0 0.0
        %334 = vmatprep.subr.mxu0 0.0
        %335 = vmatpush1.msra.mxu0 0.0
        %336 = vmatprep.subr.mxu0 0.0
        %337 = vmatpush1.msra.mxu0 0.0
        %338 = vmatprep.subr.mxu0 0.0
        %339 = vmatpush1.msra.mxu0 0.0
        %340 = vmatprep.subr.mxu0 0.0
        %341 = vmatpush1.msra.mxu0 0.0
        %342 = vmatprep.subr.mxu0 0.0
        %343 = vmatpush1.msra.mxu0 0.0
        %344 = vmatprep.subr.mxu0 0.0
        %345 = vmatpush1.msra.mxu0 0.0
        %346 = vmatprep.subr.mxu0 0.0
        %347 = vmatpush1.msra.mxu0 0.0
        %348 = vmatprep.subr.mxu0 0.0
        %349 = vmatpush1.msra.mxu0 0.0
        %350 = vmatprep.mubr.f32.mxu0 0.0
        %351 = vmatmul.mubr.f32.gmra.mrb[0].mxu0 %v264
        %v352 = vpop.f32.mrb[0].mxu0
        %v353 = vadd.f32 %v285, %v352
        %v354 = vpop.f32.mrb[0].mxu0
        %355 = vdwg.mxu0
        %v356 = vld [vmem:[%s230] sm:$0xff]
        %v357 = vadd.f32 %v353, %v356
        %358 = vadd.xlane.f32.xlu0 %v357
        %v359 = vpop.xlane.xlu0 %358
        %v360 = vmul.f32 %v359, 0.0078125
        %v361 = vsub.f32 %v357, %v360
        %v362 = vmul.f32 %v361, %v361
        %363 = vadd.xlane.f32.xlu0 %v362
        %v364 = vpop.xlane.xlu0 %363
        %v365 = vmul.f32 %v364, 0.0078125
        %v366 = vadd.f32 %v365, 1e-12
        %v367 = vrsqrt.pop %v366
        %v368 = vmul.f32 %v361, %v367
        %v369 = vlaneseq
        %v370 = vshrl.u32 %v369, 7
        %v371 = vsub.s32 1, %v370
        %v372 = vrot.slane %v281, %v371
        %v373 = vmul.f32 %v372, %v368
        %v374 = vlaneseq
        %v375 = vshrl.u32 %v374, 7
        %v376 = vsub.s32 2, %v375
        %v377 = vrot.slane %v281, %v376
        %v378 = vadd.f32 %v373, %v377
        %379 = vst [vmem:[%s263] sm:$0xff] %v378
        %s380 = sand.u32 %s126, 1
        %s381 = scalar_lea.sflag [#allocation4], %s380
        %s382 = sand.u32 %s126, 1
        %s383 = smul.addr %s382, 8
        %s384 = scalar_lea.vmem [#allocation8], %s383
        // Predicated region
        $region49: #{_bert_self_output_core.1} parent=35 // pred_check
          %p385 = pneg %p136
        $region50: #{_bert_self_output_core.1} parent=35 // pred_check_branch
          %387 = sbr.rel (%p385) target = $region52
        $region51: #{_bert_self_output_core.1} parent=35 // pred_region
          %s389 = ssub.s32 128, 128
          %390 = vsyncadd %s381, %s389
          %s391 = smul.addr %s24, 128
          %s392 = scalar_lea.hbm %s4, %s391
          %s394 = sshll.u32 %s384, 4
          %s395 = int_to_ptr.vmem [resolvable:$true] %s394
          %397 = dma.vmem_to_hbm [thread:$0]  %s395, 128, %s392, %s381
        $region52: #{_bert_self_output_core.1} parent=35 // pred_fallthru
          _
      $region36: #{_bert_self_output_core.1} parent=5 // pred_fallthru
        _
      %p398 = scmp.le.s32.totalorder 2, %s19
      // Predicated region
      $region53: #{_bert_self_output_core.1} parent=5 // pred_check
        %p399 = pneg %p398
      $region54: #{_bert_self_output_core.1} parent=5 // pred_check_branch
        %401 = sbr.rel (%p399) target = $region56
      $region55: #{_bert_self_output_core.1} parent=5 // pred_region
        %s402 = ssub.s32 %s19, 2
        // Predicated region
        $region57: #{_bert_self_output_core.1} parent=55 // pred_check
          %p403 = pneg %p142
        $region58: #{_bert_self_output_core.1} parent=55 // pred_check_branch
          %405 = sbr.rel (%p403) target = $region60
        $region59: #{_bert_self_output_core.1} parent=55 // pred_region
          %s406 = sand.u32 %s127, 1
          %s407 = scalar_lea.sflag [#allocation4], %s406
          %s408 = sand.u32 %s127, 1
          %s409 = smul.addr %s408, 8
          %s410 = scalar_lea.vmem [#allocation8], %s409
          %411 = dma.done %s407, 128
        $region60: #{_bert_self_output_core.1} parent=55 // pred_fallthru
          _
      $region56: #{_bert_self_output_core.1} parent=5 // pred_fallthru
        _
    $region6: #{_bert_self_output_core.1} parent=1 // loop_footer
      %s23 = sadd.s32 1, %s19
    $region7: #{_bert_self_output_core.1} parent=1 // loop_footer_branch
      %18 = sbr.rel target = $region3
    $region8: #{_bert_self_output_core.1} parent=1 // loop_exit
      _
    %412 = vsyncpa [#allocation3], 1
    %s413 = scalar_lea.sflag [#allocation3], 1
    %414 = vsyncpa %s413, 1
    %415 = vsyncpa [#allocation6], 1
    %s416 = scalar_lea.sflag [#allocation6], 1
    %417 = vsyncpa %s416, 1
    %418 = vsyncpa [#allocation4], 1
    %s419 = scalar_lea.sflag [#allocation4], 1
    %420 = vsyncpa %s419, 1

</llo_original>
